<compile_context>
chip_gen: v5e
topology: v5e:2x2
jax: 0.10.0
libtpu: 0.0.40
codegen_flags: <defaults>
</compile_context>

<pallas_src>
import functools

import jax
import jax.numpy as jnp
from jax.experimental import pallas as pl
from jax.experimental.pallas import tpu as pltpu


def _round_up(v: int, m: int) -> int:
    return (v + m - 1) // m * m


def _cdiv(a: int, b: int) -> int:
    return -(-a // b)


def mlp_kernel(x_ref, w1_ref, w2_ref, w3_ref, b1_ref, b2_ref, b3_ref, o_ref):
    # x_ref: (TB, I)            w1_ref: (I,   H_p)   b1_ref: (1, H_p) f32
    # o_ref: (TB, O_p)          w2_ref: (H_p, H_p)   b2_ref: (1, H_p) f32
    #                           w3_ref: (H_p, O_p)   b3_ref: (1, O_p) f32
    wdt = w1_ref.dtype

    # fc1 + ReLU  (cast LHS to the weight dtype so bf16 weights use the bf16 MXU path)
    h = jnp.dot(x_ref[...].astype(wdt), w1_ref[...], preferred_element_type=jnp.float32)
    h = jnp.maximum(h + b1_ref[...], 0.0)
    # fc2 + ReLU
    h = jnp.dot(h.astype(wdt), w2_ref[...], preferred_element_type=jnp.float32)
    h = jnp.maximum(h + b2_ref[...], 0.0)
    # fc3 (no activation)
    h = jnp.dot(h.astype(wdt), w3_ref[...], preferred_element_type=jnp.float32)
    o_ref[...] = (h + b3_ref[...]).astype(o_ref.dtype)


def prepare_params(w1, b1, w2, b2, w3, b3, *, weight_dtype=None):
    """One-time packing: pad each layer's output width to a multiple of 128.

    Padded weight columns/rows and padded bias lanes are exactly zero, so the
    padded activation lanes stay zero through bias+ReLU and the wrapper just
    slices them off.  Call this once at init and reuse the result every step.
    Pass weight_dtype=jnp.bfloat16 on v6e/v7x to halve weight DMA/VMEM.
    """
    wdt = jnp.dtype(weight_dtype) if weight_dtype is not None else jnp.dtype(w1.dtype)
    I, H = w1.shape
    O = w3.shape[1]
    H_p = _round_up(H, 128)
    O_p = _round_up(O, 128)

    def pad_w(w, rows, cols):
        out = jnp.zeros((rows, cols), wdt)
        return out.at[: w.shape[0], : w.shape[1]].set(w.astype(wdt))

    def pad_b(b, cols):
        b = jnp.asarray(b, jnp.float32).reshape(1, -1)
        return jnp.zeros((1, cols), jnp.float32).at[:, : b.shape[1]].set(b)

    return dict(
        w1=pad_w(w1, I, H_p),     # K dim stays the true I: x is passed unpadded
        w2=pad_w(w2, H_p, H_p),
        w3=pad_w(w3, H_p, O_p),
        b1=pad_b(b1, H_p),
        b2=pad_b(b2, H_p),
        b3=pad_b(b3, O_p),
    )


def _choose_batch_tiling(B: int, batch_tile: int):
    n_tiles = max(1, _cdiv(B, batch_tile))
    # v7x has 2 TensorCores: give the "parallel" batch axis >=2 grid steps when
    # there is enough real work (also lets BlockSpec pipeline the x/out DMAs).
    if n_tiles < 2 and B > 8:
        n_tiles = 2
    # Even split rounded to the sublane (8) -> <8 wasted rows per tile instead
    # of up to TB-1 for awkward batch sizes.
    TB = _round_up(_cdiv(B, n_tiles), 8)
    return n_tiles, TB


def _vmem_limit_bytes(TB, I, H_p, O_p, w_itemsize, x_itemsize):
    # Double-buffered inputs/outputs (weights included: constant index maps are
    # fetched once but BlockSpec still allocates 2 buffers) + f32 intermediates.
    w_bytes = (I * H_p + H_p * H_p + H_p * O_p) * w_itemsize
    b_bytes = (2 * H_p + O_p) * 4
    io_bytes = TB * (I + O_p) * x_itemsize
    interm_bytes = 3 * TB * max(H_p, O_p) * 4
    est = 2 * (w_bytes + b_bytes + io_bytes) + interm_bytes
    # ~25% headroom, clamped to a sane range (scoped defaults are 16/32 MiB).
    return int(min(max(est * 5 // 4 + (4 << 20), 32 << 20), 100 << 20))


def net_forward(x, params, out_features, *, batch_tile=256):
    """x: (..., input_size); params from prepare_params. Returns (..., out_features)."""
    w1, w2, w3 = params["w1"], params["w2"], params["w3"]
    b1, b2, b3 = params["b1"], params["b2"], params["b3"]
    I, H_p = w1.shape
    O_p = w3.shape[1]

    lead = x.shape[:-1]
    x2 = x.reshape(-1, I)
    B = x2.shape[0]

    n_tiles, TB = _choose_batch_tiling(B, batch_tile)
    B_pad = n_tiles * TB
    if B_pad != B:
        # Batch padding only; the feature dim stays at its true width I.
        x2 = jnp.pad(x2, ((0, B_pad - B), (0, 0)))

    out = pl.pallas_call(
        mlp_kernel,
        out_shape=jax.ShapeDtypeStruct((B_pad, O_p), x.dtype),
        grid=(n_tiles,),
        in_specs=[
            # Activations: tiled over batch, full-extent (unpadded) feature dim.
            pl.BlockSpec((TB, I), lambda i: (i, 0)),
            # Weights / biases: constant index maps -> fetched once, resident.
            pl.BlockSpec((I, H_p), lambda i: (0, 0)),
            pl.BlockSpec((H_p, H_p), lambda i: (0, 0)),
            pl.BlockSpec((H_p, O_p), lambda i: (0, 0)),
            pl.BlockSpec((1, H_p), lambda i: (0, 0)),
            pl.BlockSpec((1, H_p), lambda i: (0, 0)),
            pl.BlockSpec((1, O_p), lambda i: (0, 0)),
        ],
        out_specs=pl.BlockSpec((TB, O_p), lambda i: (i, 0)),
        compiler_params=pltpu.CompilerParams(
            # Batch tiles are independent -> shard across v7x's 2 TensorCores.
            dimension_semantics=("parallel",),
            vmem_limit_bytes=_vmem_limit_bytes(
                TB, I, H_p, O_p, w1.dtype.itemsize, x.dtype.itemsize
            ),
        ),
    )(x2, w1, w2, w3, b1, b2, b3)

    # Drop batch and feature padding.
    return out[:B, :out_features].reshape(*lead, out_features)


def init_linear_params(key, in_features, out_features, dtype=jnp.float32):
    """Deterministic init mimicking PyTorch nn.Linear default (uniform +/- 1/sqrt(in))."""
    kw, kb = jax.random.split(key)
    bound = 1.0 / jnp.sqrt(jnp.asarray(in_features, dtype))
    # stored as (in, out) so the kernel does x @ W
    w = jax.random.uniform(kw, (in_features, out_features), dtype, -bound, bound)
    b = jax.random.uniform(kb, (1, out_features), dtype, -bound, bound)
    return w, b


if __name__ == "__main__":
    input_size, hidden_size, output_size = 32, 64, 16
    batch = 8

    key = jax.random.PRNGKey(0)
    k_x, k1, k2, k3 = jax.random.split(key, 4)

    x = jax.random.normal(k_x, (batch, input_size), jnp.float32)
    w1, b1 = init_linear_params(k1, input_size, hidden_size)
    w2, b2 = init_linear_params(k2, hidden_size, hidden_size)
    w3, b3 = init_linear_params(k3, hidden_size, output_size)

    # One-time packing, hoisted out of the per-call path.  (For large models on
    # v6e/v7x pass weight_dtype=jnp.bfloat16; kept f32 here for an exact check.)
    params = prepare_params(w1, b1, w2, b2, w3, b3)

    fwd = jax.jit(lambda xx: net_forward(xx, params, output_size))
    out = fwd(x)
    jax.block_until_ready(out)

    # Reference check in plain JAX
    ref = jnp.maximum(x @ w1 + b1, 0.0)
    ref = jnp.maximum(ref @ w2 + b2, 0.0)
    ref = ref @ w3 + b3
    assert out.shape == (batch, output_size)
    assert jnp.allclose(out, ref, atol=3e-5, rtol=3e-5), float(
        jnp.max(jnp.abs(out - ref))
    )

    print("KERNEL_OK")
</pallas_src>

<mosaic_0001>
module attributes {stable_mosaic.version = 11 : i64} {
  func.func @mlp_kernel(%arg0: i32, %arg1: memref<8x32xf32, #tpu.memory_space<vmem>>, %arg2: memref<32x128xf32, #tpu.memory_space<vmem>>, %arg3: memref<128x128xf32, #tpu.memory_space<vmem>>, %arg4: memref<128x128xf32, #tpu.memory_space<vmem>>, %arg5: memref<1x128xf32, #tpu.memory_space<vmem>>, %arg6: memref<1x128xf32, #tpu.memory_space<vmem>>, %arg7: memref<1x128xf32, #tpu.memory_space<vmem>>, %arg8: memref<8x128xf32, #tpu.memory_space<vmem>>) attributes {dimension_semantics = [#tpu.dimension_semantics<parallel>], iteration_bounds = array<i64: 1>, scalar_prefetch = 0 : i64, scratch_operands = 0 : i64, tpu.core_type = #tpu.core_type<tc>, window_params = [{transform_indices = @transform_0, window_bounds = array<i64: 8, 32>}, {pipeline_mode = #tpu.pipeline_mode<synchronous>, transform_indices = @transform_1, window_bounds = array<i64: 32, 128>}, {pipeline_mode = #tpu.pipeline_mode<synchronous>, transform_indices = @transform_2, window_bounds = array<i64: 128, 128>}, {pipeline_mode = #tpu.pipeline_mode<synchronous>, transform_indices = @transform_3, window_bounds = array<i64: 128, 128>}, {pipeline_mode = #tpu.pipeline_mode<synchronous>, transform_indices = @transform_4, window_bounds = array<i64: 1, 128>}, {pipeline_mode = #tpu.pipeline_mode<synchronous>, transform_indices = @transform_5, window_bounds = array<i64: 1, 128>}, {pipeline_mode = #tpu.pipeline_mode<synchronous>, transform_indices = @transform_6, window_bounds = array<i64: 1, 128>}, {transform_indices = @transform_7, window_bounds = array<i64: 8, 128>}]} {
    %c0 = arith.constant 0 : index
    %c0_0 = arith.constant 0 : index
    %0 = vector.load %arg1[%c0, %c0_0] : memref<8x32xf32, #tpu.memory_space<vmem>>, vector<8x32xf32>
    %c0_1 = arith.constant 0 : index
    %c0_2 = arith.constant 0 : index
    %1 = vector.load %arg2[%c0_1, %c0_2] : memref<32x128xf32, #tpu.memory_space<vmem>>, vector<32x128xf32>
    %cst = arith.constant dense<0.000000e+00> : vector<8x128xf32>
    %2 = tpu.matmul %0, %1, %cst {dimension_numbers = #tpu.dot_dimension_numbers<[1], [0], [0], [1], [0, 0, 1, 1], [], []>} : vector<8x32xf32>, vector<32x128xf32>, vector<8x128xf32> -> vector<8x128xf32>
    %c0_3 = arith.constant 0 : index
    %c0_4 = arith.constant 0 : index
    %3 = vector.load %arg5[%c0_3, %c0_4] : memref<1x128xf32, #tpu.memory_space<vmem>>, vector<1x128xf32>
    %4 = vector.broadcast %3 : vector<1x128xf32> to vector<8x128xf32>
    %5 = arith.addf %2, %4 : vector<8x128xf32>
    %cst_5 = arith.constant 0.000000e+00 : f32
    %6 = vector.broadcast %cst_5 : f32 to vector<8x128xf32>
    %7 = arith.maximumf %5, %6 : vector<8x128xf32>
    %c0_6 = arith.constant 0 : index
    %c0_7 = arith.constant 0 : index
    %8 = vector.load %arg3[%c0_6, %c0_7] : memref<128x128xf32, #tpu.memory_space<vmem>>, vector<128x128xf32>
    %cst_8 = arith.constant dense<0.000000e+00> : vector<8x128xf32>
    %9 = tpu.matmul %7, %8, %cst_8 {dimension_numbers = #tpu.dot_dimension_numbers<[1], [0], [0], [1], [0, 0, 1, 1], [], []>} : vector<8x128xf32>, vector<128x128xf32>, vector<8x128xf32> -> vector<8x128xf32>
    %c0_9 = arith.constant 0 : index
    %c0_10 = arith.constant 0 : index
    %10 = vector.load %arg6[%c0_9, %c0_10] : memref<1x128xf32, #tpu.memory_space<vmem>>, vector<1x128xf32>
    %11 = vector.broadcast %10 : vector<1x128xf32> to vector<8x128xf32>
    %12 = arith.addf %9, %11 : vector<8x128xf32>
    %cst_11 = arith.constant 0.000000e+00 : f32
    %13 = vector.broadcast %cst_11 : f32 to vector<8x128xf32>
    %14 = arith.maximumf %12, %13 : vector<8x128xf32>
    %c0_12 = arith.constant 0 : index
    %c0_13 = arith.constant 0 : index
    %15 = vector.load %arg4[%c0_12, %c0_13] : memref<128x128xf32, #tpu.memory_space<vmem>>, vector<128x128xf32>
    %cst_14 = arith.constant dense<0.000000e+00> : vector<8x128xf32>
    %16 = tpu.matmul %14, %15, %cst_14 {dimension_numbers = #tpu.dot_dimension_numbers<[1], [0], [0], [1], [0, 0, 1, 1], [], []>} : vector<8x128xf32>, vector<128x128xf32>, vector<8x128xf32> -> vector<8x128xf32>
    %c0_15 = arith.constant 0 : index
    %c0_16 = arith.constant 0 : index
    %17 = vector.load %arg7[%c0_15, %c0_16] : memref<1x128xf32, #tpu.memory_space<vmem>>, vector<1x128xf32>
    %18 = vector.broadcast %17 : vector<1x128xf32> to vector<8x128xf32>
    %19 = arith.addf %16, %18 : vector<8x128xf32>
    %c0_17 = arith.constant 0 : index
    %c0_18 = arith.constant 0 : index
    %20 = vector.load %arg8[%c0_17, %c0_18] : memref<8x128xf32, #tpu.memory_space<vmem>>, vector<8x128xf32>
    tpu.vector_store %arg8[%c0_17, %c0_18], %19 {strides = array<i32>} : memref<8x128xf32, #tpu.memory_space<vmem>>, vector<8x128xf32>,
    return
  }
  func.func @transform_0(%arg0: i32) -> (i32, i32) {
    %c0_i32 = arith.constant 0 : i32
    %c0_i32_0 = arith.constant 0 : i32
    return %arg0, %c0_i32 : i32, i32
  }
  func.func @transform_1(%arg0: i32) -> (i32, i32) {
    %c0_i32 = arith.constant 0 : i32
    %c0_i32_0 = arith.constant 0 : i32
    %c0_i32_1 = arith.constant 0 : i32
    return %c0_i32, %c0_i32_0 : i32, i32
  }
  func.func @transform_2(%arg0: i32) -> (i32, i32) {
    %c0_i32 = arith.constant 0 : i32
    %c0_i32_0 = arith.constant 0 : i32
    %c0_i32_1 = arith.constant 0 : i32
    return %c0_i32, %c0_i32_0 : i32, i32
  }
  func.func @transform_3(%arg0: i32) -> (i32, i32) {
    %c0_i32 = arith.constant 0 : i32
    %c0_i32_0 = arith.constant 0 : i32
    %c0_i32_1 = arith.constant 0 : i32
    return %c0_i32, %c0_i32_0 : i32, i32
  }
  func.func @transform_4(%arg0: i32) -> (i32, i32) {
    %c0_i32 = arith.constant 0 : i32
    %c0_i32_0 = arith.constant 0 : i32
    %c0_i32_1 = arith.constant 0 : i32
    return %c0_i32, %c0_i32_0 : i32, i32
  }
  func.func @transform_5(%arg0: i32) -> (i32, i32) {
    %c0_i32 = arith.constant 0 : i32
    %c0_i32_0 = arith.constant 0 : i32
    %c0_i32_1 = arith.constant 0 : i32
    return %c0_i32, %c0_i32_0 : i32, i32
  }
  func.func @transform_6(%arg0: i32) -> (i32, i32) {
    %c0_i32 = arith.constant 0 : i32
    %c0_i32_0 = arith.constant 0 : i32
    %c0_i32_1 = arith.constant 0 : i32
    return %c0_i32, %c0_i32_0 : i32, i32
  }
  func.func @transform_7(%arg0: i32) -> (i32, i32) {
    %c0_i32 = arith.constant 0 : i32
    %c0_i32_0 = arith.constant 0 : i32
    return %arg0, %c0_i32 : i32, i32
  }
}

</mosaic_0001>

<llo_original>
// kernel: _lambda_.1
$region0: #{_lambda_.1}
  #allocation0 [shape = 'u32[]', space=smem, size = 0x4, offset = 0x4, fixed_abs, tag = 'smem constant byte address 0x4 - core index']
  #allocation1 [shape = 'u32[72,128]{1,0:T(1,128)}', space=vmem, size = 0x9000, scoped, tag = 'internal scratch']
  %s0 = inlined_call_operand.hbm [shape: f32[8,32], index: 0, kind: input, shape index: {}]
  %s1 = inlined_call_operand.hbm [shape: f32[32,128], index: 1, kind: input, shape index: {}]
  %s2 = inlined_call_operand.hbm [shape: f32[128,128], index: 2, kind: input, shape index: {}]
  %s3 = inlined_call_operand.hbm [shape: f32[128,128], index: 3, kind: input, shape index: {}]
  %s4 = inlined_call_operand.vmem [shape: f32[1,128], index: 4, kind: input, shape index: {}]
  %s5 = inlined_call_operand.vmem [shape: f32[1,128], index: 5, kind: input, shape index: {}]
  %s6 = inlined_call_operand.vmem [shape: f32[1,128], index: 6, kind: input, shape index: {}]
  %s7 = inlined_call_operand.hbm [shape: f32[8,128], index: 7, kind: output, shape index: {}]
  %s8 = sld [smem:[#allocation0]]
  $region54: #{_lambda_.1} parent=0
    _
  %s10 = ssub.s32 1, %s8
  %s11 = scalar_select 0, %s10, %s8
  $region1: #{_lambda_.1} parent=0
    #allocation2 [shape = 'u8[4096]{0}', space=vmem, size = 0x1000, scoped, tag = 'input window, operand 0, single buffered']
    #allocation3 [shape = 's32[1]{0}', space=sflag, size = 0x4, scoped, tag = 'scoped memory for _lambda_.1']
    #allocation4 [shape = 's32[1]{0}', space=sflag, size = 0x4, scoped, tag = 'scoped memory for _lambda_.1']
    #allocation5 [shape = 'u8[16384]{0}', space=vmem, size = 0x4000, scoped, tag = 'input window, operand 1, single buffered']
    #allocation6 [shape = 's32[1]{0}', space=sflag, size = 0x4, scoped, tag = 'scoped memory for _lambda_.1']
    #allocation7 [shape = 'u8[65536]{0}', space=vmem, size = 0x10000, scoped, tag = 'input window, operand 2, single buffered']
    #allocation8 [shape = 'u8[65536]{0}', space=vmem, size = 0x10000, scoped, tag = 'input window, operand 3, single buffered']
    #allocation9 [shape = 's32[1]{0}', space=sflag, size = 0x4, scoped, tag = 'scoped memory for _lambda_.1']
    #allocation10 [shape = 'u8[4096]{0}', space=vmem, size = 0x1000, scoped, tag = 'output window, operand 0, single buffered']
    %12 = vsyncpa [#allocation3], 0
    %13 = vsyncpa [#allocation6], 0
    %14 = vsyncpa [#allocation9], 0
    %15 = vsyncpa [#allocation4], 0
    // Predicated region
    $region2: #{_lambda_.1} parent=1 // pred_check
      _
    $region3: #{_lambda_.1} parent=1 // pred_check_branch
      %17 = sbr.rel (0) target = $region5
    $region4: #{_lambda_.1} parent=1 // pred_region
      %19 = vsyncadd [#allocation3], 0
      %s21 = sshll.u32 %s0, 4
      %s22 = int_to_ptr.hbm [resolvable:$true] %s21
      %s23 = sshll.u32 [#allocation2], 4
      %s24 = int_to_ptr.vmem [resolvable:$true] %s23
      %26 = dma.hbm_to_vmem [thread:$0]  %s22, 128, %s24, [#allocation3]
    $region5: #{_lambda_.1} parent=1 // pred_fallthru
      _
    // Predicated region
    $region6: #{_lambda_.1} parent=1 // pred_check
      _
    $region7: #{_lambda_.1} parent=1 // pred_check_branch
      %28 = sbr.rel (0) target = $region9
    $region8: #{_lambda_.1} parent=1 // pred_region
      %30 = vsyncadd [#allocation6], 0
      %s31 = sshll.u32 %s1, 4
      %s32 = int_to_ptr.hbm [resolvable:$true] %s31
      %s33 = sshll.u32 [#allocation5], 4
      %s34 = int_to_ptr.vmem [resolvable:$true] %s33
      %39 = dma.hbm_to_vmem [thread:$0]  %s32, 512, %s34, [#allocation6], 128, 128, 8
    $region9: #{_lambda_.1} parent=1 // pred_fallthru
      _
    // Predicated region
    $region10: #{_lambda_.1} parent=1 // pred_check
      _
    $region11: #{_lambda_.1} parent=1 // pred_check_branch
      %41 = sbr.rel (0) target = $region13
    $region12: #{_lambda_.1} parent=1 // pred_region
      %43 = vsyncadd [#allocation6], 0
      %s44 = sshll.u32 %s2, 4
      %s45 = int_to_ptr.hbm [resolvable:$true] %s44
      %s46 = sshll.u32 [#allocation7], 4
      %s47 = int_to_ptr.vmem [resolvable:$true] %s46
      %52 = dma.hbm_to_vmem [thread:$0]  %s45, 2048, %s47, [#allocation6], 128, 128, 8
    $region13: #{_lambda_.1} parent=1 // pred_fallthru
      _
    // Predicated region
    $region14: #{_lambda_.1} parent=1 // pred_check
      _
    $region15: #{_lambda_.1} parent=1 // pred_check_branch
      %54 = sbr.rel (0) target = $region17
    $region16: #{_lambda_.1} parent=1 // pred_region
      %56 = vsyncadd [#allocation9], 0
      %s57 = sshll.u32 %s3, 4
      %s58 = int_to_ptr.hbm [resolvable:$true] %s57
      %s59 = sshll.u32 [#allocation8], 4
      %s60 = int_to_ptr.vmem [resolvable:$true] %s59
      %65 = dma.hbm_to_vmem [thread:$0]  %s58, 2048, %s60, [#allocation9], 128, 128, 8
    $region17: #{_lambda_.1} parent=1 // pred_fallthru
      _
    // Predicated region
    $region18: #{_lambda_.1} parent=1 // pred_check
      _
    $region19: #{_lambda_.1} parent=1 // pred_check_branch
      %67 = sbr.rel (0) target = $region21
    $region20: #{_lambda_.1} parent=1 // pred_region
      _
    $region21: #{_lambda_.1} parent=1 // pred_fallthru
      _
    // Predicated region
    $region22: #{_lambda_.1} parent=1 // pred_check
      _
    $region23: #{_lambda_.1} parent=1 // pred_check_branch
      %69 = sbr.rel (0) target = $region25
    $region24: #{_lambda_.1} parent=1 // pred_region
      _
    $region25: #{_lambda_.1} parent=1 // pred_fallthru
      _
    // Predicated region
    $region26: #{_lambda_.1} parent=1 // pred_check
      _
    $region27: #{_lambda_.1} parent=1 // pred_check_branch
      %71 = sbr.rel (0) target = $region29
    $region28: #{_lambda_.1} parent=1 // pred_region
      _
    $region29: #{_lambda_.1} parent=1 // pred_fallthru
      _
    // Predicated region
    $region30: #{_lambda_.1} parent=1 // pred_check
      _
    $region31: #{_lambda_.1} parent=1 // pred_check_branch
      %73 = sbr.rel (0) target = $region33
    $region32: #{_lambda_.1} parent=1 // pred_region
      %75 = dma.done [#allocation3], 128
    $region33: #{_lambda_.1} parent=1 // pred_fallthru
      _
    // Predicated region
    $region34: #{_lambda_.1} parent=1 // pred_check
      _
    $region35: #{_lambda_.1} parent=1 // pred_check_branch
      %77 = sbr.rel (0) target = $region37
    $region36: #{_lambda_.1} parent=1 // pred_region
      %79 = dma.done [#allocation6], 512
    $region37: #{_lambda_.1} parent=1 // pred_fallthru
      _
    // Predicated region
    $region38: #{_lambda_.1} parent=1 // pred_check
      _
    $region39: #{_lambda_.1} parent=1 // pred_check_branch
      %81 = sbr.rel (0) target = $region41
    $region40: #{_lambda_.1} parent=1 // pred_region
      %83 = dma.done [#allocation6], 2048
    $region41: #{_lambda_.1} parent=1 // pred_fallthru
      _
    // Predicated region
    $region42: #{_lambda_.1} parent=1 // pred_check
      _
    $region43: #{_lambda_.1} parent=1 // pred_check_branch
      %85 = sbr.rel (0) target = $region45
    $region44: #{_lambda_.1} parent=1 // pred_region
      %87 = dma.done [#allocation9], 2048
    $region45: #{_lambda_.1} parent=1 // pred_fallthru
      _
    %v88 = vld [vmem:[#allocation2] sm:$0xff]
    %v89 = vld [vmem:[#allocation5] sm:$0xff]
    %v90 = vld [vmem:[#allocation5 + $0x8] sm:$0xff]
    %v91 = vld [vmem:[#allocation5 + $0x10] sm:$0xff]
    %v92 = vld [vmem:[#allocation5 + $0x18] sm:$0xff]
    %v93 = vld [vmem:[%s4] sm:$0x1]
    %v95 = vperm.slane %v93, 0
    %vm97 = vcmask 261120
    %v99 = vsel %vm97, %v88, 0
    %101 = vmatpush.msra.mxu0 0.0
    %102 = vmatpush.msra.mxu0 0.0
    %103 = vmatpush.msra.mxu0 0.0
    %104 = vmatpush.msra.mxu0 0.0
    %105 = vmatpush.msra.mxu0 0.0
    %106 = vmatpush.msra.mxu0 0.0
    %107 = vmatpush.msra.mxu0 0.0
    %108 = vmatpush.msra.mxu0 0.0
    %109 = vmatpush.msra.mxu0 0.0
    %110 = vmatpush.msra.mxu0 0.0
    %111 = vmatpush.msra.mxu0 0.0
    %112 = vmatpush.msra.mxu0 0.0
    %113 = vmatpush.msra.mxu0 %v92
    %114 = vmatpush.msra.mxu0 %v91
    %115 = vmatpush.msra.mxu0 %v90
    %116 = vmatpush.msra.mxu0 %v89
    %117 = vmatmul.f32.gmra.mxu0 %v99
    %v118 = vpop.f32.mrf.mxu0
    %v119 = vadd.f32 %v95, %v118
    %120 = vdwg.mxu0
    %v121 = vmax.f32 %v119, 0.0
    %v122 = vld [vmem:[#allocation7] sm:$0xff]
    %v123 = vld [vmem:[#allocation7 + $0x8] sm:$0xff]
    %v124 = vld [vmem:[#allocation7 + $0x10] sm:$0xff]
    %v125 = vld [vmem:[#allocation7 + $0x18] sm:$0xff]
    %v126 = vld [vmem:[#allocation7 + $0x20] sm:$0xff]
    %v127 = vld [vmem:[#allocation7 + $0x28] sm:$0xff]
    %v128 = vld [vmem:[#allocation7 + $0x30] sm:$0xff]
    %v129 = vld [vmem:[#allocation7 + $0x38] sm:$0xff]
    %v130 = vld [vmem:[#allocation7 + $0x40] sm:$0xff]
    %v131 = vld [vmem:[#allocation7 + $0x48] sm:$0xff]
    %v132 = vld [vmem:[#allocation7 + $0x50] sm:$0xff]
    %v133 = vld [vmem:[#allocation7 + $0x58] sm:$0xff]
    %v134 = vld [vmem:[#allocation7 + $0x60] sm:$0xff]
    %v135 = vld [vmem:[#allocation7 + $0x68] sm:$0xff]
    %v136 = vld [vmem:[#allocation7 + $0x70] sm:$0xff]
    %v137 = vld [vmem:[#allocation7 + $0x78] sm:$0xff]
    %v138 = vld [vmem:[%s5] sm:$0x1]
    %v140 = vperm.slane %v138, 0
    %142 = vmatpush.msra.mxu0 %v137
    %143 = vmatpush.msra.mxu0 %v136
    %144 = vmatpush.msra.mxu0 %v135
    %145 = vmatpush.msra.mxu0 %v134
    %146 = vmatpush.msra.mxu0 %v133
    %147 = vmatpush.msra.mxu0 %v132
    %148 = vmatpush.msra.mxu0 %v131
    %149 = vmatpush.msra.mxu0 %v130
    %150 = vmatpush.msra.mxu0 %v129
    %151 = vmatpush.msra.mxu0 %v128
    %152 = vmatpush.msra.mxu0 %v127
    %153 = vmatpush.msra.mxu0 %v126
    %154 = vmatpush.msra.mxu0 %v125
    %155 = vmatpush.msra.mxu0 %v124
    %156 = vmatpush.msra.mxu0 %v123
    %157 = vmatpush.msra.mxu0 %v122
    %158 = vmatmul.f32.gmra.mxu0 %v121
    %v159 = vpop.f32.mrf.mxu0
    %v160 = vadd.f32 %v140, %v159
    %161 = vdwg.mxu0
    %v162 = vmax.f32 %v160, 0.0
    %v163 = vld [vmem:[#allocation8] sm:$0xff]
    %v164 = vld [vmem:[#allocation8 + $0x8] sm:$0xff]
    %v165 = vld [vmem:[#allocation8 + $0x10] sm:$0xff]
    %v166 = vld [vmem:[#allocation8 + $0x18] sm:$0xff]
    %v167 = vld [vmem:[#allocation8 + $0x20] sm:$0xff]
    %v168 = vld [vmem:[#allocation8 + $0x28] sm:$0xff]
    %v169 = vld [vmem:[#allocation8 + $0x30] sm:$0xff]
    %v170 = vld [vmem:[#allocation8 + $0x38] sm:$0xff]
    %v171 = vld [vmem:[#allocation8 + $0x40] sm:$0xff]
    %v172 = vld [vmem:[#allocation8 + $0x48] sm:$0xff]
    %v173 = vld [vmem:[#allocation8 + $0x50] sm:$0xff]
    %v174 = vld [vmem:[#allocation8 + $0x58] sm:$0xff]
    %v175 = vld [vmem:[#allocation8 + $0x60] sm:$0xff]
    %v176 = vld [vmem:[#allocation8 + $0x68] sm:$0xff]
    %v177 = vld [vmem:[#allocation8 + $0x70] sm:$0xff]
    %v178 = vld [vmem:[#allocation8 + $0x78] sm:$0xff]
    %v179 = vld [vmem:[%s6] sm:$0x1]
    %v181 = vperm.slane %v179, 0
    %183 = vmatpush.msra.mxu0 %v178
    %184 = vmatpush.msra.mxu0 %v177
    %185 = vmatpush.msra.mxu0 %v176
    %186 = vmatpush.msra.mxu0 %v175
    %187 = vmatpush.msra.mxu0 %v174
    %188 = vmatpush.msra.mxu0 %v173
    %189 = vmatpush.msra.mxu0 %v172
    %190 = vmatpush.msra.mxu0 %v171
    %191 = vmatpush.msra.mxu0 %v170
    %192 = vmatpush.msra.mxu0 %v169
    %193 = vmatpush.msra.mxu0 %v168
    %194 = vmatpush.msra.mxu0 %v167
    %195 = vmatpush.msra.mxu0 %v166
    %196 = vmatpush.msra.mxu0 %v165
    %197 = vmatpush.msra.mxu0 %v164
    %198 = vmatpush.msra.mxu0 %v163
    %199 = vmatmul.f32.gmra.mxu0 %v162
    %v200 = vpop.f32.mrf.mxu0
    %v201 = vadd.f32 %v181, %v200
    %202 = vdwg.mxu0
    %203 = vst [vmem:[#allocation10] sm:$0xff] %v201
    // Predicated region
    $region46: #{_lambda_.1} parent=1 // pred_check
      _
    $region47: #{_lambda_.1} parent=1 // pred_check_branch
      %205 = sbr.rel (0) target = $region49
    $region48: #{_lambda_.1} parent=1 // pred_region
      %207 = vsyncadd [#allocation4], 0
      %s209 = sshll.u32 [#allocation10], 4
      %s210 = int_to_ptr.vmem [resolvable:$true] %s209
      %s211 = sshll.u32 %s7, 4
      %s212 = int_to_ptr.hbm [resolvable:$true] %s211
      %214 = dma.vmem_to_hbm [thread:$0]  %s210, 128, %s212, [#allocation4]
    $region49: #{_lambda_.1} parent=1 // pred_fallthru
      _
    // Predicated region
    $region50: #{_lambda_.1} parent=1 // pred_check
      _
    $region51: #{_lambda_.1} parent=1 // pred_check_branch
      %216 = sbr.rel (0) target = $region53
    $region52: #{_lambda_.1} parent=1 // pred_region
      %218 = dma.done [#allocation4], 128
    $region53: #{_lambda_.1} parent=1 // pred_fallthru
      _
    %219 = vsyncpa [#allocation3], 1
    %220 = vsyncpa [#allocation6], 1
    %221 = vsyncpa [#allocation9], 1
    %222 = vsyncpa [#allocation4], 1

</llo_original>
